<compile_context>
chip_gen: v6e
topology: v6e:2x2x1
jax: 0.10.0
libtpu: 0.0.40
codegen_flags: <defaults>
</compile_context>

<pallas_src>
import numpy as np
import jax
import jax.numpy as jnp
from jax.experimental import pallas as pl
from jax.experimental.pallas import tpu as pltpu

_LANES = 128                        # lane width (last dim of every block)
_TARGET_BLOCK_BYTES = 4 * 1024 * 1024   # ~4 MiB per block (2-8 MiB sweet spot)
_VMEM_LIMIT_BYTES = 32 * 1024 * 1024    # safe scoped-VMEM cap on v5e/v6e/v7x


def _sublane_tile(dtype) -> int:
    """Sublane tile for a dtype: 8 (4-byte), 16 (2-byte), 32 (1-byte)."""
    itemsize = np.dtype(dtype).itemsize
    return max(8, 32 // itemsize)


def _standardize_kernel(scalars_ref, x_ref, out_ref):
    # scalars_ref (SMEM, f32): [0] = mean, [1] = 1/stdev
    mean = scalars_ref[0]
    inv_std = scalars_ref[1]
    x = x_ref[...].astype(jnp.float32)
    out_ref[...] = ((x - mean) * inv_std).astype(out_ref.dtype)


def standardize_pallas(x, mean, stdev, *, target_block_bytes=_TARGET_BLOCK_BYTES):
    """(x - mean) / stdev for any input shape, via a row-tiled Pallas kernel."""
    orig_shape = x.shape
    in_dtype = x.dtype
    # PyTorch's (x - mean) / stdev promotes integer inputs to float.
    out_dtype = in_dtype if jnp.issubdtype(in_dtype, jnp.floating) else jnp.float32

    n = int(np.prod(orig_shape)) if len(orig_shape) > 0 else 1
    if n == 0:
        return jnp.zeros(orig_shape, out_dtype)

    flat = x.reshape(-1)
    sub = _sublane_tile(in_dtype)
    layout_tile = sub * _LANES

    # ---- layout: lane-dense (rows, 128) slab -------------------------------
    if n % layout_tile == 0:
        # Fast path: no pad, no trailing slice — zero extra HBM traffic.
        padded_n = n
        rows = n // _LANES
        x2 = flat.reshape(rows, _LANES)
    else:
        # Ragged sizes: pad up to one layout tile (single extra pass,
        # unavoidable here because n is not even a multiple of 128).
        padded_n = ((n + layout_tile - 1) // layout_tile) * layout_tile
        flat = jnp.pad(flat, (0, padded_n - n))
        rows = padded_n // _LANES
        x2 = flat.reshape(rows, _LANES)

    # ---- block size: ~target_block_bytes per block -------------------------
    in_itemsize = np.dtype(in_dtype).itemsize
    out_itemsize = np.dtype(out_dtype).itemsize
    tb = max(sub, target_block_bytes // (_LANES * in_itemsize))
    if tb >= rows:
        tb = rows                       # single block == full array: always legal
    else:
        # Multiple of 32 sublanes covers the tiling rules of every dtype width.
        tb = max(sub, (tb // 32) * 32)
    grid = (pl.cdiv(rows, tb),)

    scalars = jnp.array([mean, 1.0 / stdev], dtype=jnp.float32)

    bytes_accessed = rows * _LANES * (in_itemsize + out_itemsize)
    out2 = pl.pallas_call(
        _standardize_kernel,
        out_shape=jax.ShapeDtypeStruct((rows, _LANES), out_dtype),
        grid_spec=pltpu.PrefetchScalarGridSpec(
            num_scalar_prefetch=1,
            grid=grid,
            in_specs=[pl.BlockSpec((tb, _LANES), lambda i, s: (i, 0))],
            out_specs=pl.BlockSpec((tb, _LANES), lambda i, s: (i, 0)),
        ),
        compiler_params=pltpu.CompilerParams(
            dimension_semantics=("parallel",),
            vmem_limit_bytes=_VMEM_LIMIT_BYTES),
        cost_estimate=pl.CostEstimate(
            flops=2 * rows * _LANES,
            transcendentals=0,
            bytes_accessed=bytes_accessed),
    )(scalars, x2)

    if padded_n != n:
        out2 = out2.reshape(-1)[:n]
    return out2.reshape(orig_shape)


class StandardizePallas:
    """JAX/Pallas port of Standardize(mean, stdev)."""

    def __init__(self, mean=0.0, stdev=1.0):
        self.mean = mean
        self.stdev = stdev

    def __call__(self, x):
        return standardize_pallas(x, self.mean, self.stdev)


if __name__ == "__main__":
    key = jax.random.PRNGKey(0)
    mean, stdev = 0.5, 2.0
    transform = StandardizePallas(mean=mean, stdev=stdev)

    # Aligned case (fast path, no pad): 2*4*16*16 = 2048 elements.
    x = jax.random.normal(key, (2, 4, 16, 16), dtype=jnp.float32)
    out = jax.block_until_ready(transform(x))
    ref = (x - mean) / stdev
    np.testing.assert_allclose(np.asarray(out), np.asarray(ref),
                               rtol=1e-6, atol=1e-6)

    # Ragged case (pad path): 3*5*7 = 105 elements.
    x2 = jax.random.normal(jax.random.PRNGKey(1), (3, 5, 7), dtype=jnp.float32)
    out2 = jax.block_until_ready(transform(x2))
    ref2 = (x2 - mean) / stdev
    np.testing.assert_allclose(np.asarray(out2), np.asarray(ref2),
                               rtol=1e-6, atol=1e-6)

    print("KERNEL_OK")
</pallas_src>

<mosaic_0001>
module attributes {stable_mosaic.version = 11 : i64} {
  func.func @_standardize_kernel(%arg0: i32, %arg1: memref<2xf32, #tpu.memory_space<smem>>, %arg2: memref<16x128xf32, #tpu.memory_space<vmem>>, %arg3: memref<16x128xf32, #tpu.memory_space<vmem>>) attributes {dimension_semantics = [#tpu.dimension_semantics<parallel>], iteration_bounds = array<i64: 1>, scalar_prefetch = 1 : i64, scratch_operands = 0 : i64, tpu.core_type = #tpu.core_type<tc>, window_params = [{transform_indices = @transform_0, window_bounds = array<i64: 16, 128>}, {transform_indices = @transform_1, window_bounds = array<i64: 16, 128>}]} {
    %c0 = arith.constant 0 : index
    %0 = memref.load %arg1[%c0] : memref<2xf32, #tpu.memory_space<smem>>
    %c1 = arith.constant 1 : index
    %1 = memref.load %arg1[%c1] : memref<2xf32, #tpu.memory_space<smem>>
    %c0_0 = arith.constant 0 : index
    %c0_1 = arith.constant 0 : index
    %2 = vector.load %arg2[%c0_0, %c0_1] : memref<16x128xf32, #tpu.memory_space<vmem>>, vector<16x128xf32>
    %3 = vector.broadcast %0 : f32 to vector<16x128xf32>
    %4 = arith.subf %2, %3 : vector<16x128xf32>
    %5 = vector.broadcast %1 : f32 to vector<16x128xf32>
    %6 = arith.mulf %4, %5 : vector<16x128xf32>
    %c0_2 = arith.constant 0 : index
    %c0_3 = arith.constant 0 : index
    %7 = vector.load %arg3[%c0_2, %c0_3] : memref<16x128xf32, #tpu.memory_space<vmem>>, vector<16x128xf32>
    tpu.vector_store %arg3[%c0_2, %c0_3], %6 {strides = array<i32>} : memref<16x128xf32, #tpu.memory_space<vmem>>, vector<16x128xf32>,
    return
  }
  func.func @transform_0(%arg0: i32, %arg1: memref<2xf32, #tpu.memory_space<smem>>) -> (i32, i32) {
    %c0_i32 = arith.constant 0 : i32
    %c0_i32_0 = arith.constant 0 : i32
    return %arg0, %c0_i32 : i32, i32
  }
  func.func @transform_1(%arg0: i32, %arg1: memref<2xf32, #tpu.memory_space<smem>>) -> (i32, i32) {
    %c0_i32 = arith.constant 0 : i32
    %c0_i32_0 = arith.constant 0 : i32
    return %arg0, %c0_i32 : i32, i32
  }
}

</mosaic_0001>

<llo_original>
// kernel: tpu_custom_call.1
$region0: #{tpu_custom_call.1}
  #allocation0 [shape = 'u32[]', space=smem, size = 0x4, offset = 0x4, fixed_abs, tag = 'smem constant byte address 0x4 - core index']
  #allocation1 [shape = 'u32[144,128]{1,0:T(1,128)}', space=vmem, size = 0x12000, scoped, tag = 'internal scratch']
  #allocation2 [shape = 's32[1]{0}', space=sflag, size = 0x4, scoped, tag = 'scoped memory for tpu_custom_call.1']
  #allocation3 [shape = 'u8[512]{0}', space=smem, size = 0x200, scoped, tag = 'prefetched SMEM operand 0']
  %s0 = inlined_call_operand.hbm [shape: f32[2], index: 0, kind: input, shape index: {}]
  %s1 = inlined_call_operand.hbm [shape: f32[16,128], index: 1, kind: input, shape index: {}]
  %s2 = inlined_call_operand.hbm [shape: f32[16,128], index: 2, kind: output, shape index: {}]
  %s3 = sld [smem:[#allocation0]]
  $region18: #{tpu_custom_call.1} parent=0
    _
  %s5 = ssub.s32 1, %s3
  %s6 = scalar_select 0, %s5, %s3
  %8 = dma.hbm_to_smem %s0, 16, [#allocation3], [#allocation2]
  %9 = dma.done [#allocation2], 16
  %10 = sfence
  $region1: #{tpu_custom_call.1} parent=0
    #allocation4 [shape = 'u8[8192]{0}', space=vmem, size = 0x2000, scoped, tag = 'input window, operand 1, single buffered']
    #allocation5 [shape = 's32[1]{0}', space=sflag, size = 0x4, scoped, tag = 'scoped memory for tpu_custom_call.1']
    #allocation6 [shape = 's32[1]{0}', space=sflag, size = 0x4, scoped, tag = 'scoped memory for tpu_custom_call.1']
    #allocation7 [shape = 'u8[8192]{0}', space=vmem, size = 0x2000, scoped, tag = 'output window, operand 0, single buffered']
    %11 = vsyncpa [#allocation5], 0
    %12 = vsyncpa [#allocation6], 0
    // Predicated region
    $region2: #{tpu_custom_call.1} parent=1 // pred_check
      _
    $region3: #{tpu_custom_call.1} parent=1 // pred_check_branch
      %14 = sbr.rel (0) target = $region5
    $region4: #{tpu_custom_call.1} parent=1 // pred_region
      %s16 = ssub.s32 256, 256
      %17 = vsyncadd [#allocation5], %s16
      %s18 = sshll.u32 [#allocation4], 4
      %s19 = int_to_ptr.vmem [resolvable:$true] %s18
      %24 = dma.hbm_to_vmem [thread:$0]  %s1, 256, %s19, [#allocation5], 128, 128, 8
    $region5: #{tpu_custom_call.1} parent=1 // pred_fallthru
      _
    // Predicated region
    $region6: #{tpu_custom_call.1} parent=1 // pred_check
      _
    $region7: #{tpu_custom_call.1} parent=1 // pred_check_branch
      %26 = sbr.rel (0) target = $region9
    $region8: #{tpu_custom_call.1} parent=1 // pred_region
      %27 = dma.done [#allocation5], 256
    $region9: #{tpu_custom_call.1} parent=1 // pred_fallthru
      _
    %s28 = sld [smem:[#allocation3]]
    %s29 = sld [smem:[#allocation3 + $0x1]]
    %v30 = vld [vmem:[#allocation4] sm:$0xff]
    %v31 = vld [vmem:[#allocation4 + $0x8] sm:$0xff]
    %v32 = vstv %s28
    %v33 = vsub.f32 %v30, %v32
    %v34 = vsub.f32 %v31, %v32
    %v35 = vstv %s29
    %v36 = vmul.f32 %v33, %v35
    %v37 = vmul.f32 %v34, %v35
    %38 = vst [vmem:[#allocation7] sm:$0xff] %v36
    %39 = vst [vmem:[#allocation7 + $0x8] sm:$0xff] %v37
    // Predicated region
    $region10: #{tpu_custom_call.1} parent=1 // pred_check
      _
    $region11: #{tpu_custom_call.1} parent=1 // pred_check_branch
      %41 = sbr.rel (0) target = $region13
    $region12: #{tpu_custom_call.1} parent=1 // pred_region
      %s43 = ssub.s32 256, 256
      %44 = vsyncadd [#allocation6], %s43
      %s45 = sshll.u32 [#allocation7], 4
      %s46 = int_to_ptr.vmem [resolvable:$true] %s45
      %51 = dma.vmem_to_hbm [thread:$0]  %s46, 256, %s2, [#allocation6], 128, 128, 8
    $region13: #{tpu_custom_call.1} parent=1 // pred_fallthru
      _
    // Predicated region
    $region14: #{tpu_custom_call.1} parent=1 // pred_check
      _
    $region15: #{tpu_custom_call.1} parent=1 // pred_check_branch
      %53 = sbr.rel (0) target = $region17
    $region16: #{tpu_custom_call.1} parent=1 // pred_region
      %54 = dma.done [#allocation6], 256
    $region17: #{tpu_custom_call.1} parent=1 // pred_fallthru
      _
    %55 = vsyncpa [#allocation5], 1
    %56 = vsyncpa [#allocation6], 1

</llo_original>
